<compile_context>
chip_gen: v5e
topology: v5e:2x2
jax: 0.10.0
libtpu: 0.0.40
codegen_flags: <defaults>
</compile_context>

<pallas_src>
import functools
import numpy as np
import jax
import jax.numpy as jnp
from jax.experimental import pallas as pl
from jax.experimental.pallas import tpu as pltpu


def _round_up(x, m):
    return ((x + m - 1) // m) * m


def _choose_tb(batch, tb_max):
    """Batch tile that minimizes padding, rounded to 16 rows; forces >=2 grid steps
    (both v7x TensorCores busy) whenever the batch is large enough to split."""
    n_tiles = max((batch + tb_max - 1) // tb_max, 1)
    if n_tiles == 1 and batch >= 32:
        n_tiles = 2
    return _round_up((batch + n_tiles - 1) // n_tiles, 16)


def _policy_kernel(obs_ref, eps_ref, w1_ref, b1_ref, w2_ref, b2_ref,
                   wmu_ref, bmu_ref, std_ref, lpc_ref, out_ref, *, act_dim):
    # --- MLP trunk: bf16 MXU matmuls with f32 accumulation, f32 elementwise tail ---
    h1 = jnp.dot(obs_ref[...], w1_ref[...], preferred_element_type=jnp.float32) + b1_ref[...]
    h1 = jnp.maximum(h1, 0.0)

    h2 = jnp.dot(h1.astype(w2_ref.dtype), w2_ref[...],
                 preferred_element_type=jnp.float32) + b2_ref[...]
    h2 = jnp.maximum(h2, 0.0)

    mu = jnp.dot(h2.astype(wmu_ref.dtype), wmu_ref[...],
                 preferred_element_type=jnp.float32) + bmu_ref[...]      # (TB, A_pad) f32

    # --- reparameterized sample; padded lanes of mu/std/eps are exactly 0 ---
    eps = eps_ref[...]                                                   # (TB, A_pad) f32
    act = mu + std_ref[...] * eps

    # --- log_prob: z = (act - mu)/std == eps exactly; padded lanes contribute 0 ---
    lp = -0.5 * jnp.sum(eps * eps, axis=-1, keepdims=True) + lpc_ref[0, 0]   # (TB, 1)

    # Merge log_prob into the spare padded lane `act_dim` of the act slab (single
    # lane-dense store instead of a second (TB, 128) output stream).
    lane = jax.lax.broadcasted_iota(jnp.int32, act.shape, 1)
    out_ref[...] = jnp.where(lane == act_dim, lp, act).astype(out_ref.dtype)


def prepare_gaussian_policy_params(params, compute_dtype=jnp.bfloat16):
    """One-time padding / dtype prep of the GaussianMLP parameters (hoisted out of the
    per-call path so weights are never re-read/re-written in HBM per forward)."""
    f32 = jnp.float32
    D, H = params["w1"].shape
    A = params["w_mu"].shape[1]
    D_pad = _round_up(D, 128)
    H_pad = _round_up(H, 128)
    A_pad = _round_up(A + 1, 128)        # +1 guarantees a spare lane for the merged log_prob

    log_std = params["log_std"].astype(f32).reshape(1, A)
    return {
        "w1":   jnp.zeros((D_pad, H_pad), compute_dtype).at[:D, :H].set(params["w1"].astype(compute_dtype)),
        "b1":   jnp.zeros((1, H_pad), f32).at[:, :H].set(params["b1"].reshape(1, H).astype(f32)),
        "w2":   jnp.zeros((H_pad, H_pad), compute_dtype).at[:H, :H].set(params["w2"].astype(compute_dtype)),
        "b2":   jnp.zeros((1, H_pad), f32).at[:, :H].set(params["b2"].reshape(1, H).astype(f32)),
        "w_mu": jnp.zeros((H_pad, A_pad), compute_dtype).at[:H, :A].set(params["w_mu"].astype(compute_dtype)),
        "b_mu": jnp.zeros((1, A_pad), f32).at[:, :A].set(params["b_mu"].reshape(1, A).astype(f32)),
        "std":  jnp.zeros((1, A_pad), f32).at[:, :A].set(jnp.exp(log_std)),
        "lp_const": (-jnp.sum(log_std) - 0.5 * A * np.log(2.0 * np.pi)).reshape(1, 1).astype(f32),
    }


def gaussian_policy_forward(obs, eps, prepared, act_dim, *, tb=1024):
    """Fused MLP + rsample + log_prob. obs: (B, D), eps: (B, A), prepared: output of
    prepare_gaussian_policy_params. Returns (act (B, A) f32, log_prob (B, 1) f32)."""
    B, D = obs.shape
    A = act_dim
    f32 = jnp.float32
    compute_dtype = prepared["w1"].dtype
    D_pad, H_pad = prepared["w1"].shape
    A_pad = prepared["w_mu"].shape[1]

    TB = _choose_tb(B, tb)
    B_pad = _round_up(B, TB)
    grid = (B_pad // TB,)

    # --- per-call padding only for the streamed activations (weights pre-padded) ---
    obs_p = jnp.zeros((B_pad, D_pad), compute_dtype).at[:B, :D].set(obs.astype(compute_dtype))
    eps_p = jnp.zeros((B_pad, A_pad), f32).at[:B, :A].set(eps.astype(f32))   # keep eps f32

    in_specs = [
        pl.BlockSpec((TB, D_pad), lambda i: (i, 0)),         # obs   (streamed per tile)
        pl.BlockSpec((TB, A_pad), lambda i: (i, 0)),         # eps   (streamed per tile)
        pl.BlockSpec((D_pad, H_pad), lambda i: (0, 0)),      # w1    (resident)
        pl.BlockSpec((1, H_pad), lambda i: (0, 0)),          # b1
        pl.BlockSpec((H_pad, H_pad), lambda i: (0, 0)),      # w2
        pl.BlockSpec((1, H_pad), lambda i: (0, 0)),          # b2
        pl.BlockSpec((H_pad, A_pad), lambda i: (0, 0)),      # w_mu
        pl.BlockSpec((1, A_pad), lambda i: (0, 0)),          # b_mu
        pl.BlockSpec((1, A_pad), lambda i: (0, 0)),          # std = exp(log_std)
        pl.BlockSpec(memory_space=pltpu.MemorySpace.SMEM),   # lp_const scalar (1,1)
    ]
    out_specs = pl.BlockSpec((TB, A_pad), lambda i: (i, 0))  # act slab + log_prob column

    # VMEM budgeting (only force a limit when the default scoped budget is too small;
    # sized against v7x's 64 MiB physical VMEM).
    cb = jnp.dtype(compute_dtype).itemsize
    weight_bytes = (D_pad * H_pad + H_pad * H_pad + H_pad * A_pad) * cb \
        + (2 * H_pad + 3 * A_pad) * 4
    io_bytes = 2 * (TB * D_pad * cb + TB * A_pad * 4) + 2 * (TB * A_pad * 4)
    scratch_bytes = 3 * TB * H_pad * 4 + 2 * TB * A_pad * 4
    vmem_est = 2 * weight_bytes + io_bytes + scratch_bytes
    vmem_limit = int(min(vmem_est + (4 << 20), 64 << 20)) if vmem_est > (16 << 20) else None

    out = pl.pallas_call(
        functools.partial(_policy_kernel, act_dim=A),
        out_shape=jax.ShapeDtypeStruct((B_pad, A_pad), f32),
        grid=grid,
        in_specs=in_specs,
        out_specs=out_specs,
        compiler_params=pltpu.CompilerParams(
            dimension_semantics=("parallel",),       # batch tiles shard across v7x's 2 TCs
            vmem_limit_bytes=vmem_limit),
    )(obs_p, eps_p, prepared["w1"], prepared["b1"], prepared["w2"], prepared["b2"],
      prepared["w_mu"], prepared["b_mu"], prepared["std"], prepared["lp_const"])

    return out[:B, :A], out[:B, A:A + 1]


def init_params(key, obs_dim, hidden_dim, act_dim):
    ks = jax.random.split(key, 6)
    s1 = 1.0 / np.sqrt(obs_dim)
    s2 = 1.0 / np.sqrt(hidden_dim)
    return {
        "w1": jax.random.uniform(ks[0], (obs_dim, hidden_dim), jnp.float32, -s1, s1),
        "b1": jax.random.uniform(ks[1], (1, hidden_dim), jnp.float32, -s1, s1),
        "w2": jax.random.uniform(ks[2], (hidden_dim, hidden_dim), jnp.float32, -s2, s2),
        "b2": jax.random.uniform(ks[3], (1, hidden_dim), jnp.float32, -s2, s2),
        "w_mu": jax.random.uniform(ks[4], (hidden_dim, act_dim), jnp.float32, -s2, s2),
        "b_mu": jax.random.uniform(ks[5], (1, act_dim), jnp.float32, -s2, s2),
        "log_std": jnp.zeros((1, act_dim), jnp.float32),
    }


def reference_forward(obs, params, eps):
    hi = jax.lax.Precision.HIGHEST
    h1 = jnp.maximum(jnp.dot(obs, params["w1"], precision=hi) + params["b1"], 0.0)
    h2 = jnp.maximum(jnp.dot(h1, params["w2"], precision=hi) + params["b2"], 0.0)
    mu = jnp.dot(h2, params["w_mu"], precision=hi) + params["b_mu"]
    std = jnp.exp(params["log_std"])
    act = mu + std * eps
    z = (act - mu) / std
    lp = -0.5 * z * z - params["log_std"] - 0.5 * jnp.log(2.0 * jnp.pi)
    return act, jnp.sum(lp, axis=-1, keepdims=True)


if __name__ == "__main__":
    B, OBS_DIM, HIDDEN_DIM, ACT_DIM = 2, 16, 32, 4

    key = jax.random.PRNGKey(0)
    k_param, k_obs, k_eps = jax.random.split(key, 3)

    params = init_params(k_param, OBS_DIM, HIDDEN_DIM, ACT_DIM)
    obs = jax.random.normal(k_obs, (B, OBS_DIM), jnp.float32)
    eps = jax.random.normal(k_eps, (B, ACT_DIM), jnp.float32)   # rsample noise

    prepared = prepare_gaussian_policy_params(params)           # one-time pad + bf16 cast
    act, log_prob = gaussian_policy_forward(obs, eps, prepared, ACT_DIM)
    act, log_prob = jax.block_until_ready((act, log_prob))

    act_ref, logp_ref = reference_forward(obs, params, eps)
    assert act.shape == (B, ACT_DIM) and log_prob.shape == (B, 1)
    # act goes through bf16 MXU matmuls -> loose tolerance vs. the f32 reference.
    assert np.allclose(np.asarray(act), np.asarray(act_ref), atol=5e-2, rtol=5e-2)
    # log_prob path is pure f32 (depends only on eps and log_std) -> tight tolerance.
    assert np.allclose(np.asarray(log_prob), np.asarray(logp_ref), atol=1e-4)

    print("KERNEL_OK")
</pallas_src>

<mosaic_0001>
module attributes {stable_mosaic.version = 11 : i64} {
  func.func @_policy_kernel(%arg0: i32, %arg1: memref<16x128xbf16, #tpu.memory_space<vmem>>, %arg2: memref<16x128xf32, #tpu.memory_space<vmem>>, %arg3: memref<128x128xbf16, #tpu.memory_space<vmem>>, %arg4: memref<1x128xf32, #tpu.memory_space<vmem>>, %arg5: memref<128x128xbf16, #tpu.memory_space<vmem>>, %arg6: memref<1x128xf32, #tpu.memory_space<vmem>>, %arg7: memref<128x128xbf16, #tpu.memory_space<vmem>>, %arg8: memref<1x128xf32, #tpu.memory_space<vmem>>, %arg9: memref<1x128xf32, #tpu.memory_space<vmem>>, %arg10: memref<1x1xf32, #tpu.memory_space<smem>>, %arg11: memref<16x128xf32, #tpu.memory_space<vmem>>) attributes {dimension_semantics = [#tpu.dimension_semantics<parallel>], iteration_bounds = array<i64: 1>, scalar_prefetch = 0 : i64, scratch_operands = 0 : i64, tpu.core_type = #tpu.core_type<tc>, window_params = [{transform_indices = @transform_0, window_bounds = array<i64: 16, 128>}, {transform_indices = @transform_1, window_bounds = array<i64: 16, 128>}, {pipeline_mode = #tpu.pipeline_mode<synchronous>, transform_indices = @transform_2, window_bounds = array<i64: 128, 128>}, {pipeline_mode = #tpu.pipeline_mode<synchronous>, transform_indices = @transform_3, window_bounds = array<i64: 1, 128>}, {pipeline_mode = #tpu.pipeline_mode<synchronous>, transform_indices = @transform_4, window_bounds = array<i64: 128, 128>}, {pipeline_mode = #tpu.pipeline_mode<synchronous>, transform_indices = @transform_5, window_bounds = array<i64: 1, 128>}, {pipeline_mode = #tpu.pipeline_mode<synchronous>, transform_indices = @transform_6, window_bounds = array<i64: 128, 128>}, {pipeline_mode = #tpu.pipeline_mode<synchronous>, transform_indices = @transform_7, window_bounds = array<i64: 1, 128>}, {pipeline_mode = #tpu.pipeline_mode<synchronous>, transform_indices = @transform_8, window_bounds = array<i64: 1, 128>}, {transform_indices = @transform_9, window_bounds = array<i64: 1, 1>}, {transform_indices = @transform_10, window_bounds = array<i64: 16, 128>}]} {
    %c0 = arith.constant 0 : index
    %c0_0 = arith.constant 0 : index
    %0 = vector.load %arg1[%c0, %c0_0] : memref<16x128xbf16, #tpu.memory_space<vmem>>, vector<16x128xbf16>
    %c0_1 = arith.constant 0 : index
    %c0_2 = arith.constant 0 : index
    %1 = vector.load %arg3[%c0_1, %c0_2] : memref<128x128xbf16, #tpu.memory_space<vmem>>, vector<128x128xbf16>
    %cst = arith.constant dense<0.000000e+00> : vector<16x128xf32>
    %2 = tpu.matmul %0, %1, %cst {dimension_numbers = #tpu.dot_dimension_numbers<[1], [0], [0], [1], [0, 0, 1, 1], [], []>} : vector<16x128xbf16>, vector<128x128xbf16>, vector<16x128xf32> -> vector<16x128xf32>
    %c0_3 = arith.constant 0 : index
    %c0_4 = arith.constant 0 : index
    %3 = vector.load %arg4[%c0_3, %c0_4] : memref<1x128xf32, #tpu.memory_space<vmem>>, vector<1x128xf32>
    %4 = vector.broadcast %3 : vector<1x128xf32> to vector<16x128xf32>
    %5 = arith.addf %2, %4 : vector<16x128xf32>
    %cst_5 = arith.constant 0.000000e+00 : f32
    %6 = vector.broadcast %cst_5 : f32 to vector<16x128xf32>
    %7 = arith.maximumf %5, %6 : vector<16x128xf32>
    %8 = arith.truncf %7 : vector<16x128xf32> to vector<16x128xbf16>
    %c0_6 = arith.constant 0 : index
    %c0_7 = arith.constant 0 : index
    %9 = vector.load %arg5[%c0_6, %c0_7] : memref<128x128xbf16, #tpu.memory_space<vmem>>, vector<128x128xbf16>
    %cst_8 = arith.constant dense<0.000000e+00> : vector<16x128xf32>
    %10 = tpu.matmul %8, %9, %cst_8 {dimension_numbers = #tpu.dot_dimension_numbers<[1], [0], [0], [1], [0, 0, 1, 1], [], []>} : vector<16x128xbf16>, vector<128x128xbf16>, vector<16x128xf32> -> vector<16x128xf32>
    %c0_9 = arith.constant 0 : index
    %c0_10 = arith.constant 0 : index
    %11 = vector.load %arg6[%c0_9, %c0_10] : memref<1x128xf32, #tpu.memory_space<vmem>>, vector<1x128xf32>
    %12 = vector.broadcast %11 : vector<1x128xf32> to vector<16x128xf32>
    %13 = arith.addf %10, %12 : vector<16x128xf32>
    %cst_11 = arith.constant 0.000000e+00 : f32
    %14 = vector.broadcast %cst_11 : f32 to vector<16x128xf32>
    %15 = arith.maximumf %13, %14 : vector<16x128xf32>
    %16 = arith.truncf %15 : vector<16x128xf32> to vector<16x128xbf16>
    %c0_12 = arith.constant 0 : index
    %c0_13 = arith.constant 0 : index
    %17 = vector.load %arg7[%c0_12, %c0_13] : memref<128x128xbf16, #tpu.memory_space<vmem>>, vector<128x128xbf16>
    %cst_14 = arith.constant dense<0.000000e+00> : vector<16x128xf32>
    %18 = tpu.matmul %16, %17, %cst_14 {dimension_numbers = #tpu.dot_dimension_numbers<[1], [0], [0], [1], [0, 0, 1, 1], [], []>} : vector<16x128xbf16>, vector<128x128xbf16>, vector<16x128xf32> -> vector<16x128xf32>
    %c0_15 = arith.constant 0 : index
    %c0_16 = arith.constant 0 : index
    %19 = vector.load %arg8[%c0_15, %c0_16] : memref<1x128xf32, #tpu.memory_space<vmem>>, vector<1x128xf32>
    %20 = vector.broadcast %19 : vector<1x128xf32> to vector<16x128xf32>
    %21 = arith.addf %18, %20 : vector<16x128xf32>
    %c0_17 = arith.constant 0 : index
    %c0_18 = arith.constant 0 : index
    %22 = vector.load %arg2[%c0_17, %c0_18] : memref<16x128xf32, #tpu.memory_space<vmem>>, vector<16x128xf32>
    %c0_19 = arith.constant 0 : index
    %c0_20 = arith.constant 0 : index
    %23 = vector.load %arg9[%c0_19, %c0_20] : memref<1x128xf32, #tpu.memory_space<vmem>>, vector<1x128xf32>
    %24 = vector.broadcast %23 : vector<1x128xf32> to vector<16x128xf32>
    %25 = arith.mulf %24, %22 : vector<16x128xf32>
    %26 = arith.addf %21, %25 : vector<16x128xf32>
    %27 = arith.mulf %22, %22 : vector<16x128xf32>
    %cst_21 = arith.constant dense<0.000000e+00> : vector<16xf32>
    %28 = vector.multi_reduction <add>, %27, %cst_21 [1] : vector<16x128xf32> to vector<16xf32>
    %29 = vector.shape_cast %28 : vector<16xf32> to vector<16x1xf32>
    %cst_22 = arith.constant -5.000000e-01 : f32
    %30 = vector.broadcast %cst_22 : f32 to vector<16x1xf32>
    %31 = arith.mulf %30, %29 : vector<16x1xf32>
    %c0_23 = arith.constant 0 : index
    %c0_24 = arith.constant 0 : index
    %32 = memref.load %arg10[%c0_23, %c0_24] : memref<1x1xf32, #tpu.memory_space<smem>>
    %33 = vector.broadcast %32 : f32 to vector<16x1xf32>
    %34 = arith.addf %31, %33 : vector<16x1xf32>
    %35 = tpu.iota {dimensions = array<i32: 1>} : vector<16x128xi32>
    %c4_i32 = arith.constant 4 : i32
    %36 = vector.broadcast %c4_i32 : i32 to vector<16x128xi32>
    %37 = arith.cmpi eq, %35, %36 : vector<16x128xi32>
    %38 = vector.shape_cast %34 : vector<16x1xf32> to vector<16x1xf32>
    %39 = vector.broadcast %38 : vector<16x1xf32> to vector<16x128xf32>
    %40 = arith.select %37, %39, %26 : vector<16x128xi1>, vector<16x128xf32>
    %c0_25 = arith.constant 0 : index
    %c0_26 = arith.constant 0 : index
    %41 = vector.load %arg11[%c0_25, %c0_26] : memref<16x128xf32, #tpu.memory_space<vmem>>, vector<16x128xf32>
    tpu.vector_store %arg11[%c0_25, %c0_26], %40 {strides = array<i32>} : memref<16x128xf32, #tpu.memory_space<vmem>>, vector<16x128xf32>,
    return
  }
  func.func @transform_0(%arg0: i32) -> (i32, i32) {
    %c0_i32 = arith.constant 0 : i32
    %c0_i32_0 = arith.constant 0 : i32
    return %arg0, %c0_i32 : i32, i32
  }
  func.func @transform_1(%arg0: i32) -> (i32, i32) {
    %c0_i32 = arith.constant 0 : i32
    %c0_i32_0 = arith.constant 0 : i32
    return %arg0, %c0_i32 : i32, i32
  }
  func.func @transform_2(%arg0: i32) -> (i32, i32) {
    %c0_i32 = arith.constant 0 : i32
    %c0_i32_0 = arith.constant 0 : i32
    %c0_i32_1 = arith.constant 0 : i32
    return %c0_i32, %c0_i32_0 : i32, i32
  }
  func.func @transform_3(%arg0: i32) -> (i32, i32) {
    %c0_i32 = arith.constant 0 : i32
    %c0_i32_0 = arith.constant 0 : i32
    %c0_i32_1 = arith.constant 0 : i32
    return %c0_i32, %c0_i32_0 : i32, i32
  }
  func.func @transform_4(%arg0: i32) -> (i32, i32) {
    %c0_i32 = arith.constant 0 : i32
    %c0_i32_0 = arith.constant 0 : i32
    %c0_i32_1 = arith.constant 0 : i32
    return %c0_i32, %c0_i32_0 : i32, i32
  }
  func.func @transform_5(%arg0: i32) -> (i32, i32) {
    %c0_i32 = arith.constant 0 : i32
    %c0_i32_0 = arith.constant 0 : i32
    %c0_i32_1 = arith.constant 0 : i32
    return %c0_i32, %c0_i32_0 : i32, i32
  }
  func.func @transform_6(%arg0: i32) -> (i32, i32) {
    %c0_i32 = arith.constant 0 : i32
    %c0_i32_0 = arith.constant 0 : i32
    %c0_i32_1 = arith.constant 0 : i32
    return %c0_i32, %c0_i32_0 : i32, i32
  }
  func.func @transform_7(%arg0: i32) -> (i32, i32) {
    %c0_i32 = arith.constant 0 : i32
    %c0_i32_0 = arith.constant 0 : i32
    %c0_i32_1 = arith.constant 0 : i32
    return %c0_i32, %c0_i32_0 : i32, i32
  }
  func.func @transform_8(%arg0: i32) -> (i32, i32) {
    %c0_i32 = arith.constant 0 : i32
    %c0_i32_0 = arith.constant 0 : i32
    %c0_i32_1 = arith.constant 0 : i32
    return %c0_i32, %c0_i32_0 : i32, i32
  }
  func.func @transform_9(%arg0: i32) -> (i32, i32) {
    %c0_i32 = arith.constant 0 : i32
    %c0_i32_0 = arith.constant 0 : i32
    %c0_i32_1 = arith.constant 0 : i32
    return %c0_i32, %c0_i32_0 : i32, i32
  }
  func.func @transform_10(%arg0: i32) -> (i32, i32) {
    %c0_i32 = arith.constant 0 : i32
    %c0_i32_0 = arith.constant 0 : i32
    return %arg0, %c0_i32 : i32, i32
  }
}

</mosaic_0001>

<llo_original>
// kernel: tpu_custom_call.1
$region0: #{tpu_custom_call.1}
  #allocation0 [shape = 'u32[]', space=smem, size = 0x4, offset = 0x4, fixed_abs, tag = 'smem constant byte address 0x4 - core index']
  #allocation1 [shape = 'u32[72,128]{1,0:T(1,128)}', space=vmem, size = 0x9000, scoped, tag = 'internal scratch']
  #allocation2 [shape = 'f32[1,1]{1,0:T(1,128)S(6)}', space=smem, size = 0x200, scoped, tag = 'scoped memory for tpu_custom_call.1']
  %s0 = inlined_call_operand.hbm [shape: bf16[16,128], index: 0, kind: input, shape index: {}]
  %s1 = inlined_call_operand.hbm [shape: f32[16,128], index: 1, kind: input, shape index: {}]
  %s2 = inlined_call_operand.hbm [shape: bf16[128,128], index: 2, kind: input, shape index: {}]
  %s3 = inlined_call_operand.vmem [shape: f32[1,128], index: 3, kind: input, shape index: {}]
  %s4 = inlined_call_operand.hbm [shape: bf16[128,128], index: 4, kind: input, shape index: {}]
  %s5 = inlined_call_operand.vmem [shape: f32[1,128], index: 5, kind: input, shape index: {}]
  %s6 = inlined_call_operand.hbm [shape: bf16[128,128], index: 6, kind: input, shape index: {}]
  %s7 = inlined_call_operand.vmem [shape: f32[1,128], index: 7, kind: input, shape index: {}]
  %s8 = inlined_call_operand.vmem [shape: f32[1,128], index: 8, kind: input, shape index: {}]
  %s9 = inlined_call_operand.<no memory space> [shape: f32[1,1], index: 9, kind: input, shape index: {}]
  %s10 = inlined_call_operand.hbm [shape: f32[16,128], index: 10, kind: output, shape index: {}]
  %s11 = sld [smem:[#allocation0]]
  $region70: #{tpu_custom_call.1} parent=0
    _
  %s13 = ssub.s32 1, %s11
  %s14 = scalar_select 0, %s13, %s11
  %15 = sst [smem:[#allocation2]] %s9
  $region1: #{tpu_custom_call.1} parent=0
    #allocation3 [shape = 'u8[4096]{0}', space=vmem, size = 0x1000, scoped, tag = 'input window, operand 0, single buffered']
    #allocation4 [shape = 's32[1]{0}', space=sflag, size = 0x4, scoped, tag = 'scoped memory for tpu_custom_call.1']
    #allocation5 [shape = 's32[1]{0}', space=sflag, size = 0x4, scoped, tag = 'scoped memory for tpu_custom_call.1']
    #allocation6 [shape = 'u8[8192]{0}', space=vmem, size = 0x2000, scoped, tag = 'input window, operand 1, single buffered']
    #allocation7 [shape = 's32[1]{0}', space=sflag, size = 0x4, scoped, tag = 'scoped memory for tpu_custom_call.1']
    #allocation8 [shape = 'u8[32768]{0}', space=vmem, size = 0x8000, scoped, tag = 'input window, operand 2, single buffered']
    #allocation9 [shape = 'u8[32768]{0}', space=vmem, size = 0x8000, scoped, tag = 'input window, operand 4, single buffered']
    #allocation10 [shape = 's32[1]{0}', space=sflag, size = 0x4, scoped, tag = 'scoped memory for tpu_custom_call.1']
    #allocation11 [shape = 'u8[32768]{0}', space=vmem, size = 0x8000, scoped, tag = 'input window, operand 6, single buffered']
    #allocation12 [shape = 'u8[8192]{0}', space=vmem, size = 0x2000, scoped, tag = 'output window, operand 0, single buffered']
    %16 = vsyncpa [#allocation4], 0
    %17 = vsyncpa [#allocation7], 0
    %18 = vsyncpa [#allocation10], 0
    %19 = vsyncpa [#allocation5], 0
    // Predicated region
    $region2: #{tpu_custom_call.1} parent=1 // pred_check
      _
    $region3: #{tpu_custom_call.1} parent=1 // pred_check_branch
      %21 = sbr.rel (0) target = $region5
    $region4: #{tpu_custom_call.1} parent=1 // pred_region
      %23 = vsyncadd [#allocation4], 0
      %s24 = sshll.u32 %s0, 4
      %s25 = int_to_ptr.hbm [resolvable:$true] %s24
      %s26 = sshll.u32 [#allocation3], 4
      %s27 = int_to_ptr.vmem [resolvable:$true] %s26
      %32 = dma.hbm_to_vmem [thread:$0]  %s25, 128, %s27, [#allocation4], 64, 64, 4
    $region5: #{tpu_custom_call.1} parent=1 // pred_fallthru
      _
    // Predicated region
    $region6: #{tpu_custom_call.1} parent=1 // pred_check
      _
    $region7: #{tpu_custom_call.1} parent=1 // pred_check_branch
      %34 = sbr.rel (0) target = $region9
    $region8: #{tpu_custom_call.1} parent=1 // pred_region
      %36 = vsyncadd [#allocation7], 0
      %s37 = sshll.u32 %s1, 4
      %s38 = int_to_ptr.hbm [resolvable:$true] %s37
      %s39 = sshll.u32 [#allocation6], 4
      %s40 = int_to_ptr.vmem [resolvable:$true] %s39
      %45 = dma.hbm_to_vmem [thread:$0]  %s38, 256, %s40, [#allocation7], 128, 128, 8
    $region9: #{tpu_custom_call.1} parent=1 // pred_fallthru
      _
    // Predicated region
    $region10: #{tpu_custom_call.1} parent=1 // pred_check
      _
    $region11: #{tpu_custom_call.1} parent=1 // pred_check_branch
      %47 = sbr.rel (0) target = $region13
    $region12: #{tpu_custom_call.1} parent=1 // pred_region
      %49 = vsyncadd [#allocation7], 0
      %s50 = sshll.u32 %s2, 4
      %s51 = int_to_ptr.hbm [resolvable:$true] %s50
      %s52 = sshll.u32 [#allocation8], 4
      %s53 = int_to_ptr.vmem [resolvable:$true] %s52
      %58 = dma.hbm_to_vmem [thread:$0]  %s51, 1024, %s53, [#allocation7], 64, 64, 4
    $region13: #{tpu_custom_call.1} parent=1 // pred_fallthru
      _
    // Predicated region
    $region14: #{tpu_custom_call.1} parent=1 // pred_check
      _
    $region15: #{tpu_custom_call.1} parent=1 // pred_check_branch
      %60 = sbr.rel (0) target = $region17
    $region16: #{tpu_custom_call.1} parent=1 // pred_region
      _
    $region17: #{tpu_custom_call.1} parent=1 // pred_fallthru
      _
    // Predicated region
    $region18: #{tpu_custom_call.1} parent=1 // pred_check
      _
    $region19: #{tpu_custom_call.1} parent=1 // pred_check_branch
      %62 = sbr.rel (0) target = $region21
    $region20: #{tpu_custom_call.1} parent=1 // pred_region
      %64 = vsyncadd [#allocation10], 0
      %s65 = sshll.u32 %s4, 4
      %s66 = int_to_ptr.hbm [resolvable:$true] %s65
      %s67 = sshll.u32 [#allocation9], 4
      %s68 = int_to_ptr.vmem [resolvable:$true] %s67
      %73 = dma.hbm_to_vmem [thread:$0]  %s66, 1024, %s68, [#allocation10], 64, 64, 4
    $region21: #{tpu_custom_call.1} parent=1 // pred_fallthru
      _
    // Predicated region
    $region22: #{tpu_custom_call.1} parent=1 // pred_check
      _
    $region23: #{tpu_custom_call.1} parent=1 // pred_check_branch
      %75 = sbr.rel (0) target = $region25
    $region24: #{tpu_custom_call.1} parent=1 // pred_region
      _
    $region25: #{tpu_custom_call.1} parent=1 // pred_fallthru
      _
    // Predicated region
    $region26: #{tpu_custom_call.1} parent=1 // pred_check
      _
    $region27: #{tpu_custom_call.1} parent=1 // pred_check_branch
      %77 = sbr.rel (0) target = $region29
    $region28: #{tpu_custom_call.1} parent=1 // pred_region
      %79 = vsyncadd [#allocation10], 0
      %s80 = sshll.u32 %s6, 4
      %s81 = int_to_ptr.hbm [resolvable:$true] %s80
      %s82 = sshll.u32 [#allocation11], 4
      %s83 = int_to_ptr.vmem [resolvable:$true] %s82
      %88 = dma.hbm_to_vmem [thread:$0]  %s81, 1024, %s83, [#allocation10], 64, 64, 4
    $region29: #{tpu_custom_call.1} parent=1 // pred_fallthru
      _
    // Predicated region
    $region30: #{tpu_custom_call.1} parent=1 // pred_check
      _
    $region31: #{tpu_custom_call.1} parent=1 // pred_check_branch
      %90 = sbr.rel (0) target = $region33
    $region32: #{tpu_custom_call.1} parent=1 // pred_region
      _
    $region33: #{tpu_custom_call.1} parent=1 // pred_fallthru
      _
    // Predicated region
    $region34: #{tpu_custom_call.1} parent=1 // pred_check
      _
    $region35: #{tpu_custom_call.1} parent=1 // pred_check_branch
      %92 = sbr.rel (0) target = $region37
    $region36: #{tpu_custom_call.1} parent=1 // pred_region
      _
    $region37: #{tpu_custom_call.1} parent=1 // pred_fallthru
      _
    // Predicated region
    $region38: #{tpu_custom_call.1} parent=1 // pred_check
      _
    $region39: #{tpu_custom_call.1} parent=1 // pred_check_branch
      %94 = sbr.rel (0) target = $region41
    $region40: #{tpu_custom_call.1} parent=1 // pred_region
      _
    $region41: #{tpu_custom_call.1} parent=1 // pred_fallthru
      _
    // Predicated region
    $region42: #{tpu_custom_call.1} parent=1 // pred_check
      _
    $region43: #{tpu_custom_call.1} parent=1 // pred_check_branch
      %96 = sbr.rel (0) target = $region45
    $region44: #{tpu_custom_call.1} parent=1 // pred_region
      %98 = dma.done [#allocation4], 128
    $region45: #{tpu_custom_call.1} parent=1 // pred_fallthru
      _
    // Predicated region
    $region46: #{tpu_custom_call.1} parent=1 // pred_check
      _
    $region47: #{tpu_custom_call.1} parent=1 // pred_check_branch
      %100 = sbr.rel (0) target = $region49
    $region48: #{tpu_custom_call.1} parent=1 // pred_region
      %102 = dma.done [#allocation7], 256
    $region49: #{tpu_custom_call.1} parent=1 // pred_fallthru
      _
    // Predicated region
    $region50: #{tpu_custom_call.1} parent=1 // pred_check
      _
    $region51: #{tpu_custom_call.1} parent=1 // pred_check_branch
      %104 = sbr.rel (0) target = $region53
    $region52: #{tpu_custom_call.1} parent=1 // pred_region
      %106 = dma.done [#allocation7], 1024
    $region53: #{tpu_custom_call.1} parent=1 // pred_fallthru
      _
    // Predicated region
    $region54: #{tpu_custom_call.1} parent=1 // pred_check
      _
    $region55: #{tpu_custom_call.1} parent=1 // pred_check_branch
      %108 = sbr.rel (0) target = $region57
    $region56: #{tpu_custom_call.1} parent=1 // pred_region
      %110 = dma.done [#allocation10], 1024
    $region57: #{tpu_custom_call.1} parent=1 // pred_fallthru
      _
    // Predicated region
    $region58: #{tpu_custom_call.1} parent=1 // pred_check
      _
    $region59: #{tpu_custom_call.1} parent=1 // pred_check_branch
      %112 = sbr.rel (0) target = $region61
    $region60: #{tpu_custom_call.1} parent=1 // pred_region
      %114 = dma.done [#allocation10], 1024
    $region61: #{tpu_custom_call.1} parent=1 // pred_fallthru
      _
    %v115 = vld [vmem:[#allocation3] sm:$0xf]
    %v116 = vld [vmem:[#allocation3 + $0x4] sm:$0xf]
    %v117 = vld [vmem:[#allocation8] sm:$0xf]
    %v118 = vld [vmem:[#allocation8 + $0x4] sm:$0xf]
    %v119 = vld [vmem:[#allocation8 + $0x8] sm:$0xf]
    %v120 = vld [vmem:[#allocation8 + $0xc] sm:$0xf]
    %v121 = vld [vmem:[#allocation8 + $0x10] sm:$0xf]
    %v122 = vld [vmem:[#allocation8 + $0x14] sm:$0xf]
    %v123 = vld [vmem:[#allocation8 + $0x18] sm:$0xf]
    %v124 = vld [vmem:[#allocation8 + $0x1c] sm:$0xf]
    %v125 = vld [vmem:[#allocation8 + $0x20] sm:$0xf]
    %v126 = vld [vmem:[#allocation8 + $0x24] sm:$0xf]
    %v127 = vld [vmem:[#allocation8 + $0x28] sm:$0xf]
    %v128 = vld [vmem:[#allocation8 + $0x2c] sm:$0xf]
    %v129 = vld [vmem:[#allocation8 + $0x30] sm:$0xf]
    %v130 = vld [vmem:[#allocation8 + $0x34] sm:$0xf]
    %v131 = vld [vmem:[#allocation8 + $0x38] sm:$0xf]
    %v132 = vld [vmem:[#allocation8 + $0x3c] sm:$0xf]
    %v133 = vld [vmem:[%s3] sm:$0x1]
    %v135 = vperm.slane %v133, 0
    %v139 = vunpack.c.l.b16 %v115
    %v140 = vunpack.c.l.b16 %v116
    %v141 = vpack.c.b16 %v140, %v139
    %v159 = vunpack.c.l.b16 %v117
    %v160 = vunpack.c.l.b16 %v118
    %v161 = vunpack.c.l.b16 %v119
    %v162 = vunpack.c.l.b16 %v120
    %v163 = vunpack.c.l.b16 %v121
    %v164 = vunpack.c.l.b16 %v122
    %v165 = vunpack.c.l.b16 %v123
    %v166 = vunpack.c.l.b16 %v124
    %v167 = vunpack.c.l.b16 %v125
    %v168 = vunpack.c.l.b16 %v126
    %v169 = vunpack.c.l.b16 %v127
    %v170 = vunpack.c.l.b16 %v128
    %v171 = vunpack.c.l.b16 %v129
    %v172 = vunpack.c.l.b16 %v130
    %v173 = vunpack.c.l.b16 %v131
    %v174 = vunpack.c.l.b16 %v132
    %v175 = vpack.c.b16 %v160, %v159
    %v176 = vpack.c.b16 %v162, %v161
    %v177 = vpack.c.b16 %v164, %v163
    %v178 = vpack.c.b16 %v166, %v165
    %v179 = vpack.c.b16 %v168, %v167
    %v180 = vpack.c.b16 %v170, %v169
    %v181 = vpack.c.b16 %v172, %v171
    %v182 = vpack.c.b16 %v174, %v173
    %191 = vmatpush.bf16.msra.mxu0 %v182
    %192 = vmatpush.bf16.msra.mxu0 %v181
    %193 = vmatpush.bf16.msra.mxu0 %v180
    %194 = vmatpush.bf16.msra.mxu0 %v179
    %195 = vmatpush.bf16.msra.mxu0 %v178
    %196 = vmatpush.bf16.msra.mxu0 %v177
    %197 = vmatpush.bf16.msra.mxu0 %v176
    %198 = vmatpush.bf16.msra.mxu0 %v175
    %199 = vmatmul.bf16.gmra.mxu0 %v141
    %v200 = vpop.f32.mrf.mxu0
    %v201 = vadd.f32 %v135, %v200
    %v202 = vpop.f32.mrf.mxu0
    %v203 = vadd.f32 %v135, %v202
    %204 = vdwg.mxu0
    %v205 = vmax.f32 %v201, 0.0
    %v206 = vmax.f32 %v203, 0.0
    %v207 = vpack.c.bf16 %v206, %v205
    %v208 = vld [vmem:[#allocation9] sm:$0xf]
    %v209 = vld [vmem:[#allocation9 + $0x4] sm:$0xf]
    %v210 = vld [vmem:[#allocation9 + $0x8] sm:$0xf]
    %v211 = vld [vmem:[#allocation9 + $0xc] sm:$0xf]
    %v212 = vld [vmem:[#allocation9 + $0x10] sm:$0xf]
    %v213 = vld [vmem:[#allocation9 + $0x14] sm:$0xf]
    %v214 = vld [vmem:[#allocation9 + $0x18] sm:$0xf]
    %v215 = vld [vmem:[#allocation9 + $0x1c] sm:$0xf]
    %v216 = vld [vmem:[#allocation9 + $0x20] sm:$0xf]
    %v217 = vld [vmem:[#allocation9 + $0x24] sm:$0xf]
    %v218 = vld [vmem:[#allocation9 + $0x28] sm:$0xf]
    %v219 = vld [vmem:[#allocation9 + $0x2c] sm:$0xf]
    %v220 = vld [vmem:[#allocation9 + $0x30] sm:$0xf]
    %v221 = vld [vmem:[#allocation9 + $0x34] sm:$0xf]
    %v222 = vld [vmem:[#allocation9 + $0x38] sm:$0xf]
    %v223 = vld [vmem:[#allocation9 + $0x3c] sm:$0xf]
    %v224 = vld [vmem:[%s5] sm:$0x1]
    %v226 = vperm.slane %v224, 0
    %v244 = vunpack.c.l.b16 %v208
    %v245 = vunpack.c.l.b16 %v209
    %v246 = vunpack.c.l.b16 %v210
    %v247 = vunpack.c.l.b16 %v211
    %v248 = vunpack.c.l.b16 %v212
    %v249 = vunpack.c.l.b16 %v213
    %v250 = vunpack.c.l.b16 %v214
    %v251 = vunpack.c.l.b16 %v215
    %v252 = vunpack.c.l.b16 %v216
    %v253 = vunpack.c.l.b16 %v217
    %v254 = vunpack.c.l.b16 %v218
    %v255 = vunpack.c.l.b16 %v219
    %v256 = vunpack.c.l.b16 %v220
    %v257 = vunpack.c.l.b16 %v221
    %v258 = vunpack.c.l.b16 %v222
    %v259 = vunpack.c.l.b16 %v223
    %v260 = vpack.c.b16 %v245, %v244
    %v261 = vpack.c.b16 %v247, %v246
    %v262 = vpack.c.b16 %v249, %v248
    %v263 = vpack.c.b16 %v251, %v250
    %v264 = vpack.c.b16 %v253, %v252
    %v265 = vpack.c.b16 %v255, %v254
    %v266 = vpack.c.b16 %v257, %v256
    %v267 = vpack.c.b16 %v259, %v258
    %276 = vmatpush.bf16.msra.mxu0 %v267
    %277 = vmatpush.bf16.msra.mxu0 %v266
    %278 = vmatpush.bf16.msra.mxu0 %v265
    %279 = vmatpush.bf16.msra.mxu0 %v264
    %280 = vmatpush.bf16.msra.mxu0 %v263
    %281 = vmatpush.bf16.msra.mxu0 %v262
    %282 = vmatpush.bf16.msra.mxu0 %v261
    %283 = vmatpush.bf16.msra.mxu0 %v260
    %284 = vmatmul.bf16.gmra.mxu0 %v207
    %v285 = vpop.f32.mrf.mxu0
    %v286 = vadd.f32 %v226, %v285
    %v287 = vpop.f32.mrf.mxu0
    %v288 = vadd.f32 %v226, %v287
    %289 = vdwg.mxu0
    %v290 = vmax.f32 %v286, 0.0
    %v291 = vmax.f32 %v288, 0.0
    %v292 = vpack.c.bf16 %v291, %v290
    %v293 = vld [vmem:[#allocation11] sm:$0xf]
    %v294 = vld [vmem:[#allocation11 + $0x4] sm:$0xf]
    %v295 = vld [vmem:[#allocation11 + $0x8] sm:$0xf]
    %v296 = vld [vmem:[#allocation11 + $0xc] sm:$0xf]
    %v297 = vld [vmem:[#allocation11 + $0x10] sm:$0xf]
    %v298 = vld [vmem:[#allocation11 + $0x14] sm:$0xf]
    %v299 = vld [vmem:[#allocation11 + $0x18] sm:$0xf]
    %v300 = vld [vmem:[#allocation11 + $0x1c] sm:$0xf]
    %v301 = vld [vmem:[#allocation11 + $0x20] sm:$0xf]
    %v302 = vld [vmem:[#allocation11 + $0x24] sm:$0xf]
    %v303 = vld [vmem:[#allocation11 + $0x28] sm:$0xf]
    %v304 = vld [vmem:[#allocation11 + $0x2c] sm:$0xf]
    %v305 = vld [vmem:[#allocation11 + $0x30] sm:$0xf]
    %v306 = vld [vmem:[#allocation11 + $0x34] sm:$0xf]
    %v307 = vld [vmem:[#allocation11 + $0x38] sm:$0xf]
    %v308 = vld [vmem:[#allocation11 + $0x3c] sm:$0xf]
    %v309 = vld [vmem:[%s7] sm:$0x1]
    %v311 = vperm.slane %v309, 0
    %v329 = vunpack.c.l.b16 %v293
    %v330 = vunpack.c.l.b16 %v294
    %v331 = vunpack.c.l.b16 %v295
    %v332 = vunpack.c.l.b16 %v296
    %v333 = vunpack.c.l.b16 %v297
    %v334 = vunpack.c.l.b16 %v298
    %v335 = vunpack.c.l.b16 %v299
    %v336 = vunpack.c.l.b16 %v300
    %v337 = vunpack.c.l.b16 %v301
    %v338 = vunpack.c.l.b16 %v302
    %v339 = vunpack.c.l.b16 %v303
    %v340 = vunpack.c.l.b16 %v304
    %v341 = vunpack.c.l.b16 %v305
    %v342 = vunpack.c.l.b16 %v306
    %v343 = vunpack.c.l.b16 %v307
    %v344 = vunpack.c.l.b16 %v308
    %v345 = vpack.c.b16 %v330, %v329
    %v346 = vpack.c.b16 %v332, %v331
    %v347 = vpack.c.b16 %v334, %v333
    %v348 = vpack.c.b16 %v336, %v335
    %v349 = vpack.c.b16 %v338, %v337
    %v350 = vpack.c.b16 %v340, %v339
    %v351 = vpack.c.b16 %v342, %v341
    %v352 = vpack.c.b16 %v344, %v343
    %361 = vmatpush.bf16.msra.mxu0 %v352
    %362 = vmatpush.bf16.msra.mxu0 %v351
    %363 = vmatpush.bf16.msra.mxu0 %v350
    %364 = vmatpush.bf16.msra.mxu0 %v349
    %365 = vmatpush.bf16.msra.mxu0 %v348
    %366 = vmatpush.bf16.msra.mxu0 %v347
    %367 = vmatpush.bf16.msra.mxu0 %v346
    %368 = vmatpush.bf16.msra.mxu0 %v345
    %369 = vmatmul.bf16.gmra.mxu0 %v292
    %v370 = vpop.f32.mrf.mxu0
    %v371 = vadd.f32 %v311, %v370
    %v372 = vpop.f32.mrf.mxu0
    %v373 = vadd.f32 %v311, %v372
    %374 = vdwg.mxu0
    %v375 = vld [vmem:[#allocation6] sm:$0xff]
    %v376 = vld [vmem:[#allocation6 + $0x8] sm:$0xff]
    %v377 = vld [vmem:[%s8] sm:$0x1]
    %v379 = vperm.slane %v377, 0
    %v381 = vmul.f32 %v379, %v375
    %v382 = vmul.f32 %v379, %v376
    %v383 = vadd.f32 %v371, %v381
    %v384 = vadd.f32 %v373, %v382
    %v385 = vmul.f32 %v375, %v375
    %v386 = vmul.f32 %v376, %v376
    %387 = vadd.xlane.f32.xlu0 %v385
    %v388 = vpop.xlane.xlu0 %387
    %389 = vadd.xlane.f32.xlu0 %v386
    %v390 = vpop.xlane.xlu0 %389
    %v391 = vmul.f32 %v388, -0.5
    %v392 = vmul.f32 %v390, -0.5
    %s393 = sld [smem:[#allocation2]]
    %v394 = vstv %s393
    %v395 = vadd.f32 %v391, %v394
    %v396 = vadd.f32 %v392, %v394
    %v397 = vlaneseq
    %v398 = vand.u32 %v397, 127
    %vm399 = vcmp.eq.s32.totalorder %v398, 4
    %v400 = vsel %vm399, %v395, %v383
    %v401 = vsel %vm399, %v396, %v384
    %402 = vst [vmem:[#allocation12] sm:$0xff] %v400
    %403 = vst [vmem:[#allocation12 + $0x8] sm:$0xff] %v401
    // Predicated region
    $region62: #{tpu_custom_call.1} parent=1 // pred_check
      _
    $region63: #{tpu_custom_call.1} parent=1 // pred_check_branch
      %405 = sbr.rel (0) target = $region65
    $region64: #{tpu_custom_call.1} parent=1 // pred_region
      %407 = vsyncadd [#allocation5], 0
      %s408 = sshll.u32 [#allocation12], 4
      %s409 = int_to_ptr.vmem [resolvable:$true] %s408
      %s410 = sshll.u32 %s10, 4
      %s411 = int_to_ptr.hbm [resolvable:$true] %s410
      %416 = dma.vmem_to_hbm [thread:$0]  %s409, 256, %s411, [#allocation5], 128, 128, 8
    $region65: #{tpu_custom_call.1} parent=1 // pred_fallthru
      _
    // Predicated region
    $region66: #{tpu_custom_call.1} parent=1 // pred_check
      _
    $region67: #{tpu_custom_call.1} parent=1 // pred_check_branch
      %418 = sbr.rel (0) target = $region69
    $region68: #{tpu_custom_call.1} parent=1 // pred_region
      %420 = dma.done [#allocation5], 256
    $region69: #{tpu_custom_call.1} parent=1 // pred_fallthru
      _
    %421 = vsyncpa [#allocation4], 1
    %422 = vsyncpa [#allocation7], 1
    %423 = vsyncpa [#allocation10], 1
    %424 = vsyncpa [#allocation5], 1

</llo_original>
